<compile_context>
chip_gen: v7x
topology: tpu7x:2x2x1
jax: 0.10.0
libtpu: 0.0.40
codegen_flags: <defaults>
</compile_context>

<pallas_src>
import math

import jax
import jax.numpy as jnp
from jax.experimental import pallas as pl
from jax.experimental.pallas import tpu as pltpu

EMBED_DIM = 32                  # embed_dim (must be even)
NUM_POS_FEATS = EMBED_DIM // 2  # PositionEmbeddingRandom(embed_dim // 2)
INPUT_IMAGE_SIZE = (64, 64)     # (H, W) padded input image size
_N_SPARSE = 3                   # 2 box corners + 1 "no-text" row
_OUT_W = _N_SPARSE * EMBED_DIM  # 96 output lanes per box

# Packed-weight row indices (layout contract with pack_prompt_encoder_weights).
_R_GX1, _R_GY1, _R_GX2, _R_GY2, _R_PHASE, _R_PCAT, _R_NCAT, _R_MASK = range(8)


def _prompt_encoder_kernel(boxes_ref, w_ref, out_ref):
    """Box-corner random-Fourier embeddings + confidence blend, single-sin form.

    boxes_ref: (B, 5) f32 in SMEM, rows of [x1, y1, x2, y2, conf] (raw pixels).
    w_ref:     (8, 96) f32 in VMEM, packed constants (see pack function):
               rows 0-3: normalization-folded per-corner x/y frequency rows,
               row 4: phase row (normalization offset, +pi/2 on cos lanes),
               row 5: [pt_emb0 | pt_emb1 | 0], row 6: not_emb tiled x3,
               row 7: blend mask (1 on the two corner rows, 0 on the text row).
    out_ref:   (B, 96) f32 -- contiguous (B, 3, E) in PyTorch order:
               lanes [0,32)->corner0, [32,64)->corner1, [64,96)->no-text row.
    """
    wt = w_ref[...]                                # (8, 96) -- one vreg of constants
    gx1 = wt[_R_GX1:_R_GX1 + 1, :]
    gy1 = wt[_R_GY1:_R_GY1 + 1, :]
    gx2 = wt[_R_GX2:_R_GX2 + 1, :]
    gy2 = wt[_R_GY2:_R_GY2 + 1, :]
    phase = wt[_R_PHASE:_R_PHASE + 1, :]
    pcat = wt[_R_PCAT:_R_PCAT + 1, :]
    ncat = wt[_R_NCAT:_R_NCAT + 1, :]
    m = wt[_R_MASK:_R_MASK + 1, :]

    nboxes = out_ref.shape[0]
    # Static unroll over the (tiny) batch; scalar reads ride the scalar slots.
    # TODO(synk): for large B switch to a grid over sublane-multiple row blocks
    # (batched (blk, 96) compute, "parallel" axis) instead of unrolling.
    for b in range(nboxes):
        x1 = boxes_ref[b, 0]
        y1 = boxes_ref[b, 1]
        x2 = boxes_ref[b, 2]
        y2 = boxes_ref[b, 3]
        conf = boxes_ref[b, 4]

        # Normalization / 2*pi / pi-half phase are pre-folded into the weight
        # rows, so the sin argument is 4 scalar*vector products + the phase row.
        arg = x1 * gx1 + y1 * gy1 + x2 * gx2 + y2 * gy2 + phase   # (1, 96)
        mc = m * conf                           # conf on blend lanes, 0 on text lanes
        row = (jnp.sin(arg) + pcat) * mc + ncat * (1.0 - mc)      # (1, 96)
        out_ref[b:b + 1, :] = row               # one full-row 96-lane store per box


def pack_prompt_encoder_weights(gauss, pt_emb, not_emb,
                                input_image_size=INPUT_IMAGE_SIZE):
    """One-time (init) packing of all constants into a single (8, 96) tile.

    Folds: 2*pi scale, coordinate normalization (x_n = (2/W)*x + (1/W - 1)),
    the +pi/2 cos phase, point embeddings, not-embeddings, and the blend mask.
    """
    assert EMBED_DIM % 2 == 0, "embed_dim must be even"
    F = NUM_POS_FEATS
    E = EMBED_DIM
    h, w = input_image_size
    two_pi = 2.0 * math.pi

    gauss = jnp.asarray(gauss, jnp.float32)            # (2, F)
    pt_emb = jnp.asarray(pt_emb, jnp.float32)          # (2, E)
    not_emb = jnp.asarray(not_emb, jnp.float32).reshape(E)
    assert gauss.shape == (2, F) and pt_emb.shape == (2, E)

    gx, gy = gauss[0], gauss[1]
    fx = (two_pi * 2.0 / w) * gx                       # x-frequency * fold(2/W)
    fy = (two_pi * 2.0 / h) * gy                       # y-frequency * fold(2/H)
    off = two_pi * ((1.0 / w - 1.0) * gx + (1.0 / h - 1.0) * gy)   # fold(offset)

    zF = jnp.zeros((F,), jnp.float32)
    zE = jnp.zeros((E,), jnp.float32)
    half_pi = jnp.full((F,), math.pi / 2.0, jnp.float32)

    rows = [
        jnp.concatenate([fx, fx, zF, zF, zE]),                           # GX1
        jnp.concatenate([fy, fy, zF, zF, zE]),                           # GY1
        jnp.concatenate([zF, zF, fx, fx, zE]),                           # GX2
        jnp.concatenate([zF, zF, fy, fy, zE]),                           # GY2
        jnp.concatenate([off, off + half_pi, off, off + half_pi, zE]),   # PHASE
        jnp.concatenate([pt_emb[0], pt_emb[1], zE]),                     # PCAT
        jnp.concatenate([not_emb, not_emb, not_emb]),                    # NCAT
        jnp.concatenate([jnp.ones((2 * E,), jnp.float32), zE]),          # blend mask
    ]
    packed = jnp.stack(rows, axis=0).astype(jnp.float32)                 # (8, 96)
    assert packed.shape == (8, _OUT_W)
    return packed


@jax.jit
def prompt_encoder_forward(boxes, packed_w):
    """Returns (sparse_embeddings (B, 3, E), dense_embeddings=None)."""
    bsz = boxes.shape[0]
    out = pl.pallas_call(
        _prompt_encoder_kernel,
        out_shape=jax.ShapeDtypeStruct((bsz, _OUT_W), jnp.float32),
        in_specs=[
            pl.BlockSpec(memory_space=pltpu.MemorySpace.SMEM),   # boxes: scalars
            pl.BlockSpec(memory_space=pltpu.MemorySpace.VMEM),   # packed constants
        ],
        out_specs=pl.BlockSpec(memory_space=pltpu.MemorySpace.VMEM),
    )(boxes, packed_w)
    # Row-major contiguous reshape (free metadata under jit; NOT a transpose).
    sparse = out.reshape(bsz, _N_SPARSE, EMBED_DIM)
    dense = None  # mask_prompt=False
    return sparse, dense


def _reference(boxes, gauss, pt_emb, not_emb):
    """Pure-JAX mirror of the PyTorch forward (boxes only, text=None)."""
    h, w = INPUT_IMAGE_SIZE
    bsz = boxes.shape[0]
    conf = boxes[..., -1:].reshape(-1, 1, 1)
    coords = (boxes[..., :-1] + 0.5).reshape(-1, 2, 2)
    coords = coords / jnp.array([w, h], jnp.float32)
    coords = 2.0 * coords - 1.0
    proj = (coords @ gauss) * (2.0 * math.pi)
    pe = jnp.concatenate([jnp.sin(proj), jnp.cos(proj)], axis=-1)  # (B, 2, E)
    pe = pe.at[:, 0, :].add(pt_emb[0])
    pe = pe.at[:, 1, :].add(pt_emb[1])
    box_emb = pe * conf + not_emb * (1.0 - conf)
    text_emb = jnp.broadcast_to(not_emb[None], (bsz, 1, EMBED_DIM))
    return jnp.concatenate([box_emb, text_emb], axis=1)


if __name__ == "__main__":
    key = jax.random.PRNGKey(0)
    k_gauss, k_pt, k_not, k_box, k_conf = jax.random.split(key, 5)

    bsz = 2
    h, w = INPUT_IMAGE_SIZE

    # Deterministic "weights" (nn.Embedding / buffer init ~ N(0, 1), scale=1.0)
    gauss = jax.random.normal(k_gauss, (2, NUM_POS_FEATS), jnp.float32)
    pt_emb = jax.random.normal(k_pt, (2, EMBED_DIM), jnp.float32)
    not_emb = jax.random.normal(k_not, (1, EMBED_DIM), jnp.float32)

    # Boxes: [x1, y1, x2, y2, conf]
    xy = jax.random.uniform(k_box, (bsz, 4), jnp.float32, 0.0, float(min(h, w)))
    conf = jax.random.uniform(k_conf, (bsz, 1), jnp.float32, 0.0, 1.0)
    boxes = jnp.concatenate([xy, conf], axis=-1)

    packed_w = pack_prompt_encoder_weights(gauss, pt_emb, not_emb)

    sparse, dense = prompt_encoder_forward(boxes, packed_w)
    sparse = jax.block_until_ready(sparse)

    ref = _reference(boxes, gauss, pt_emb, not_emb)
    assert sparse.shape == (bsz, _N_SPARSE, EMBED_DIM)
    assert dense is None
    # cos is computed as sin(x + pi/2) and the normalization constants are
    # folded into the weights at init, so allow a few extra f32 ulps of drift
    # (args have magnitude up to ~2*pi*||g||_1).
    assert jnp.allclose(sparse, ref, atol=5e-5, rtol=5e-5), "mismatch vs reference"

    # TODO(synk): mask_prompt branch (Conv2d/LayerNorm2d/GELU mask_downscaling),
    # kpt_prompt branch, and clip text encoding are not exercised here (module
    # defaults disable masks/kpts, and text=None uses the not_embeddings path).
    print("KERNEL_OK")
</pallas_src>

<mosaic_0001>
module attributes {stable_mosaic.version = 11 : i64} {
  func.func @_prompt_encoder_kernel(%arg0: memref<2x5xf32, #tpu.memory_space<smem>>, %arg1: memref<8x96xf32, #tpu.memory_space<vmem>>, %arg2: memref<2x96xf32, #tpu.memory_space<vmem>>) attributes {dimension_semantics = [], scalar_prefetch = 0 : i64, scratch_operands = 0 : i64, tpu.core_type = #tpu.core_type<tc>} {
    %c0 = arith.constant 0 : index
    %c0_0 = arith.constant 0 : index
    %0 = vector.load %arg1[%c0, %c0_0] : memref<8x96xf32, #tpu.memory_space<vmem>>, vector<8x96xf32>
    %1 = vector.extract_strided_slice %0 {offsets = [0, 0], sizes = [1, 96], strides = [1, 1]} : vector<8x96xf32> to vector<1x96xf32>
    %2 = vector.extract_strided_slice %0 {offsets = [1, 0], sizes = [1, 96], strides = [1, 1]} : vector<8x96xf32> to vector<1x96xf32>
    %3 = vector.extract_strided_slice %0 {offsets = [2, 0], sizes = [1, 96], strides = [1, 1]} : vector<8x96xf32> to vector<1x96xf32>
    %4 = vector.extract_strided_slice %0 {offsets = [3, 0], sizes = [1, 96], strides = [1, 1]} : vector<8x96xf32> to vector<1x96xf32>
    %5 = vector.extract_strided_slice %0 {offsets = [4, 0], sizes = [1, 96], strides = [1, 1]} : vector<8x96xf32> to vector<1x96xf32>
    %6 = vector.extract_strided_slice %0 {offsets = [5, 0], sizes = [1, 96], strides = [1, 1]} : vector<8x96xf32> to vector<1x96xf32>
    %7 = vector.extract_strided_slice %0 {offsets = [6, 0], sizes = [1, 96], strides = [1, 1]} : vector<8x96xf32> to vector<1x96xf32>
    %8 = vector.extract_strided_slice %0 {offsets = [7, 0], sizes = [1, 96], strides = [1, 1]} : vector<8x96xf32> to vector<1x96xf32>
    %c0_1 = arith.constant 0 : index
    %c0_2 = arith.constant 0 : index
    %9 = memref.load %arg0[%c0_1, %c0_2] : memref<2x5xf32, #tpu.memory_space<smem>>
    %c0_3 = arith.constant 0 : index
    %c1 = arith.constant 1 : index
    %10 = memref.load %arg0[%c0_3, %c1] : memref<2x5xf32, #tpu.memory_space<smem>>
    %c0_4 = arith.constant 0 : index
    %c2 = arith.constant 2 : index
    %11 = memref.load %arg0[%c0_4, %c2] : memref<2x5xf32, #tpu.memory_space<smem>>
    %c0_5 = arith.constant 0 : index
    %c3 = arith.constant 3 : index
    %12 = memref.load %arg0[%c0_5, %c3] : memref<2x5xf32, #tpu.memory_space<smem>>
    %c0_6 = arith.constant 0 : index
    %c4 = arith.constant 4 : index
    %13 = memref.load %arg0[%c0_6, %c4] : memref<2x5xf32, #tpu.memory_space<smem>>
    %14 = vector.broadcast %9 : f32 to vector<1x96xf32>
    %15 = arith.mulf %14, %1 : vector<1x96xf32>
    %16 = vector.broadcast %10 : f32 to vector<1x96xf32>
    %17 = arith.mulf %16, %2 : vector<1x96xf32>
    %18 = arith.addf %15, %17 : vector<1x96xf32>
    %19 = vector.broadcast %11 : f32 to vector<1x96xf32>
    %20 = arith.mulf %19, %3 : vector<1x96xf32>
    %21 = arith.addf %18, %20 : vector<1x96xf32>
    %22 = vector.broadcast %12 : f32 to vector<1x96xf32>
    %23 = arith.mulf %22, %4 : vector<1x96xf32>
    %24 = arith.addf %21, %23 : vector<1x96xf32>
    %25 = arith.addf %24, %5 : vector<1x96xf32>
    %26 = vector.broadcast %13 : f32 to vector<1x96xf32>
    %27 = arith.mulf %8, %26 : vector<1x96xf32>
    %28 = math.sin %25 : vector<1x96xf32>
    %29 = arith.addf %28, %6 : vector<1x96xf32>
    %30 = arith.mulf %29, %27 : vector<1x96xf32>
    %cst = arith.constant 1.000000e+00 : f32
    %31 = vector.broadcast %cst : f32 to vector<1x96xf32>
    %32 = arith.subf %31, %27 : vector<1x96xf32>
    %33 = arith.mulf %7, %32 : vector<1x96xf32>
    %34 = arith.addf %30, %33 : vector<1x96xf32>
    %c0_7 = arith.constant 0 : index
    %c0_8 = arith.constant 0 : index
    %35 = vector.load %arg2[%c0_7, %c0_8] : memref<2x96xf32, #tpu.memory_space<vmem>>, vector<1x96xf32>
    tpu.vector_store %arg2[%c0_7, %c0_8], %34 {strides = array<i32>} : memref<2x96xf32, #tpu.memory_space<vmem>>, vector<1x96xf32>,
    %c1_9 = arith.constant 1 : index
    %c0_10 = arith.constant 0 : index
    %36 = memref.load %arg0[%c1_9, %c0_10] : memref<2x5xf32, #tpu.memory_space<smem>>
    %c1_11 = arith.constant 1 : index
    %c1_12 = arith.constant 1 : index
    %37 = memref.load %arg0[%c1_11, %c1_12] : memref<2x5xf32, #tpu.memory_space<smem>>
    %c1_13 = arith.constant 1 : index
    %c2_14 = arith.constant 2 : index
    %38 = memref.load %arg0[%c1_13, %c2_14] : memref<2x5xf32, #tpu.memory_space<smem>>
    %c1_15 = arith.constant 1 : index
    %c3_16 = arith.constant 3 : index
    %39 = memref.load %arg0[%c1_15, %c3_16] : memref<2x5xf32, #tpu.memory_space<smem>>
    %c1_17 = arith.constant 1 : index
    %c4_18 = arith.constant 4 : index
    %40 = memref.load %arg0[%c1_17, %c4_18] : memref<2x5xf32, #tpu.memory_space<smem>>
    %41 = vector.broadcast %36 : f32 to vector<1x96xf32>
    %42 = arith.mulf %41, %1 : vector<1x96xf32>
    %43 = vector.broadcast %37 : f32 to vector<1x96xf32>
    %44 = arith.mulf %43, %2 : vector<1x96xf32>
    %45 = arith.addf %42, %44 : vector<1x96xf32>
    %46 = vector.broadcast %38 : f32 to vector<1x96xf32>
    %47 = arith.mulf %46, %3 : vector<1x96xf32>
    %48 = arith.addf %45, %47 : vector<1x96xf32>
    %49 = vector.broadcast %39 : f32 to vector<1x96xf32>
    %50 = arith.mulf %49, %4 : vector<1x96xf32>
    %51 = arith.addf %48, %50 : vector<1x96xf32>
    %52 = arith.addf %51, %5 : vector<1x96xf32>
    %53 = vector.broadcast %40 : f32 to vector<1x96xf32>
    %54 = arith.mulf %8, %53 : vector<1x96xf32>
    %55 = math.sin %52 : vector<1x96xf32>
    %56 = arith.addf %55, %6 : vector<1x96xf32>
    %57 = arith.mulf %56, %54 : vector<1x96xf32>
    %cst_19 = arith.constant 1.000000e+00 : f32
    %58 = vector.broadcast %cst_19 : f32 to vector<1x96xf32>
    %59 = arith.subf %58, %54 : vector<1x96xf32>
    %60 = arith.mulf %7, %59 : vector<1x96xf32>
    %61 = arith.addf %57, %60 : vector<1x96xf32>
    %c1_20 = arith.constant 1 : index
    %c0_21 = arith.constant 0 : index
    %62 = vector.load %arg2[%c1_20, %c0_21] : memref<2x96xf32, #tpu.memory_space<vmem>>, vector<1x96xf32>
    tpu.vector_store %arg2[%c1_20, %c0_21], %61 {strides = array<i32>} : memref<2x96xf32, #tpu.memory_space<vmem>>, vector<1x96xf32>,
    return
  }
}

</mosaic_0001>

<llo_original>
// kernel: prompt_encoder_forward.1
$region0: #{prompt_encoder_forward.1}
  #allocation0 [shape = 'u32[]', space=smem, size = 0x4, offset = 0x4, fixed_abs, tag = 'smem constant byte address 0x4 - core index']
  #allocation1 [shape = 'u32[144,128]{1,0:T(1,128)}', space=vmem, size = 0x12000, scoped, tag = 'internal scratch']
  %s0 = inlined_call_operand.hbm [shape: f32[2,5], index: 0, kind: input, shape index: {}]
  %s1 = inlined_call_operand.hbm [shape: f32[8,96], index: 1, kind: input, shape index: {}]
  %s2 = inlined_call_operand.vmem [shape: f32[2,96], index: 2, kind: output, shape index: {}]
  %s3 = sld [smem:[#allocation0]]
  $region26: #{prompt_encoder_forward.1} parent=0
    _
  %s5 = ssub.s32 1, %s3
  %s6 = scalar_select 0, %s5, %s3
  $region1: #{prompt_encoder_forward.1} parent=0
    #allocation2 [shape = 'u8[1024]{0}', space=smem, size = 0x400, scoped, tag = 'input window, operand 0, single buffered']
    #allocation3 [shape = 's32[1]{0}', space=sflag, size = 0x4, scoped, tag = 'scoped memory for prompt_encoder_forward.1']
    #allocation4 [shape = 's32[1]{0}', space=sflag, size = 0x4, scoped, tag = 'scoped memory for prompt_encoder_forward.1']
    #allocation5 [shape = 'u8[4096]{0}', space=vmem, size = 0x1000, scoped, tag = 'input window, operand 1, single buffered']
    %7 = vsyncpa [#allocation4], 0
    %8 = vsyncpa [#allocation3], 0
    // Predicated region
    $region2: #{prompt_encoder_forward.1} parent=1 // pred_check
      _
    $region3: #{prompt_encoder_forward.1} parent=1 // pred_check_branch
      %10 = sbr.rel (0) target = $region5
    $region4: #{prompt_encoder_forward.1} parent=1 // pred_region
      %s12 = ssub.s32 32, 32
      %13 = vsyncadd [#allocation4], %s12
      %16 = dma.hbm_to_smem %s0, 32, [#allocation2], [#allocation4]
    $region5: #{prompt_encoder_forward.1} parent=1 // pred_fallthru
      _
    // Predicated region
    $region6: #{prompt_encoder_forward.1} parent=1 // pred_check
      _
    $region7: #{prompt_encoder_forward.1} parent=1 // pred_check_branch
      %18 = sbr.rel (0) target = $region9
    $region8: #{prompt_encoder_forward.1} parent=1 // pred_region
      %s20 = ssub.s32 128, 128
      %21 = vsyncadd [#allocation3], %s20
      %s23 = sshll.u32 [#allocation5], 4
      %s24 = int_to_ptr.vmem [resolvable:$true] %s23
      %26 = dma.hbm_to_vmem [thread:$0]  %s1, 128, %s24, [#allocation3]
    $region9: #{prompt_encoder_forward.1} parent=1 // pred_fallthru
      _
    // Predicated region
    $region10: #{prompt_encoder_forward.1} parent=1 // pred_check
      _
    $region11: #{prompt_encoder_forward.1} parent=1 // pred_check_branch
      %28 = sbr.rel (0) target = $region13
    $region12: #{prompt_encoder_forward.1} parent=1 // pred_region
      %29 = dma.done [#allocation4], 32
    $region13: #{prompt_encoder_forward.1} parent=1 // pred_fallthru
      _
    // Predicated region
    $region14: #{prompt_encoder_forward.1} parent=1 // pred_check
      _
    $region15: #{prompt_encoder_forward.1} parent=1 // pred_check_branch
      %31 = sbr.rel (0) target = $region17
    $region16: #{prompt_encoder_forward.1} parent=1 // pred_region
      %32 = dma.done [#allocation3], 128
    $region17: #{prompt_encoder_forward.1} parent=1 // pred_fallthru
      _
    %33 = sfence
    %v34 = vld [vmem:[#allocation5] sm:$0xff]
    %s35 = sld [smem:[#allocation2]]
    %s36 = sld [smem:[#allocation2 + $0x1]]
    %s37 = sld [smem:[#allocation2 + $0x2]]
    %s38 = sld [smem:[#allocation2 + $0x3]]
    %s39 = sld [smem:[#allocation2 + $0x4]]
    %v40 = vstv %s35
    %v41 = vmul.f32 %v40, %v34
    %v42 = vstv %s36
    %v43 = vmul.f32 %v42, %v34
    %v45 = vrot.slane %v43, 1
    %v47 = vadd.f32 %v41, %v45
    %v48 = vstv %s37
    %v49 = vmul.f32 %v48, %v34
    %v51 = vrot.slane %v49, 2
    %v53 = vadd.f32 %v47, %v51
    %v54 = vstv %s38
    %v55 = vmul.f32 %v54, %v34
    %v57 = vrot.slane %v55, 3
    %v59 = vadd.f32 %v53, %v57
    %v61 = vrot.slane %v34, 4
    %v63 = vadd.f32 %v59, %v61
    %v64 = vstv %s39
    %v65 = vmul.f32 %v34, %v64
    %v66 = vand.u32 2147483647, %v63
    %vm67 = vcmp.le.f32.partialorder %v66, 0.7853982
    %vm68 = vcmp.lt.s32.totalorder %v63, 0
    %v69 = vand.u32 %v63, 2139095040
    %v70 = vshrl.u32 %v69, 23
    %v71 = vsub.s32 %v70, 127
    %v72 = vand.u32 2147483647, %v63
    %v73 = vand.u32 %v72, 8388607
    %v74 = vor.u32 %v73, 8388608
    %v75 = vsub.s32 0, %v74
    %v76 = vadd.s32 %v71, 1
    %vm77 = vcmp.gt.s32.totalorder %v76, 0
    %v78 = vsel %vm77, %v76, 0
    %v79 = vshrl.u32 %v78, 5
    %v80 = vand.u32 %v78, 31
    %v81 = vsub.s32 32, %v80
    %v82 = vshrl.u32 683565275, %v81
    %v83 = vshll.u32 683565275, %v80
    %v84 = vshrl.u32 2475754826, %v81
    %v85 = vor.u32 %v83, %v84
    %v86 = vshll.u32 2475754826, %v80
    %v87 = vshrl.u32 2131351028, %v81
    %v88 = vor.u32 %v86, %v87
    %v89 = vshll.u32 2131351028, %v80
    %v90 = vshrl.u32 2102212464, %v81
    %v91 = vor.u32 %v89, %v90
    %v92 = vshll.u32 2102212464, %v80
    %v93 = vshrl.u32 920167782, %v81
    %v94 = vor.u32 %v92, %v93
    %v95 = vshll.u32 920167782, %v80
    %v96 = vshrl.u32 1326507024, %v81
    %v97 = vor.u32 %v95, %v96
    %vm98 = vcmp.lt.s32.totalorder %v79, 1
    %vm99 = vcmp.lt.s32.totalorder %v79, 2
    %vm100 = vcmp.lt.s32.totalorder %v79, 3
    %vm101 = vcmp.lt.s32.totalorder %v79, 4
    %v102 = vsel %vm98, %v82, %v85
    %v103 = vsel %vm101, %v91, 2102212464
    %v104 = vsel %vm100, %v88, %v103
    %v105 = vsel %vm99, %v102, %v104
    %v106 = vsel %vm98, %v85, %v88
    %v107 = vsel %vm101, %v94, 920167782
    %v108 = vsel %vm100, %v91, %v107
    %v109 = vsel %vm99, %v106, %v108
    %v110 = vsel %vm98, %v88, %v91
    %v111 = vsel %vm101, %v97, 1326507024
    %v112 = vsel %vm100, %v94, %v111
    %v113 = vsel %vm99, %v110, %v112
    %v114 = vshll.u32 %v74, 8
    %v115 = vmul.u32.u64.compose %v114, %v113
    %v116 = vextract.low.u32 %v115
    %v117 = vextract.high.u32 %v115
    %v118 = vmul.u32.u64.compose %v114, %v109
    %v119 = vextract.low.u32 %v118
    %v120 = vextract.high.u32 %v118
    %v121 = vmul.u32 %v114, %v105
    %v122 = vadd.s32 %v117, %v119
    %vm123 = vc.u32 %v117, %v119
    %v124 = vadd.s32 %v120, 1
    %v125 = vsel %vm123, %v124, %v120
    %v126 = vadd.s32 %v121, %v125
    %v127 = vadd.s32 %v126, 536870912
    %v128 = vshrl.u32 %v127, 30
    %v129 = vshll.u32 %v128, 30
    %v130 = vsub.s32 %v126, %v129
    %vm131 = vcmp.lt.s32.totalorder %v130, 0
    %v132 = vsub.s32 0, %v130
    %v133 = vsel %vm131, %v132, %v130
    %v134 = vclz %v133
    %v135 = vsub.s32 %v134, 2
    %vm136 = vcmp.gt.s32.totalorder 0, %v135
    %v137 = vsel %vm136, 0, %v135
    %v138 = vsub.s32 32, %v137
    %v139 = vshll.u32 %v130, %v137
    %v140 = vshrl.u32 %v122, %v138
    %v141 = vor.u32 %v139, %v140
    %v142 = vsub.s32 4294967266, %v137
    %v143 = vadd.s32 %v142, 127
    %v144 = vshll.u32 %v143, 23
    %v145 = vor.u32 4788187, %v144
    %v146 = vand.u32 2147483647, %v145
    %v148 = vcvt.s32.f32 %v141
    %v149 = vmul.f32 %v148, %v146
    %v150 = vxor.u32 %v149, 2147483648
    %v151 = vsel %vm68, %v150, %v149
    %v152 = vsub.s32 4, %v128
    %v153 = vsel %vm68, %v152, %v128
    %v154 = vsel %vm67, %v63, %v151
    %v155 = vsel %vm67, 0, %v153
    %v156 = vcosq.f32.pop %v154
    %v157 = vsinq.f32.pop %v154
    %vm158 = vweird.f32 %v63
    %v159 = vadd.s32 %v155, 3
    %v160 = vand.u32 %v159, 3
    %vm161 = vcmp.lt.s32.totalorder %v160, 2
    %vm162 = vcmp.eq.s32.totalorder %v160, 0
    %v163 = vxor.u32 %v157, 2147483648
    %v164 = vsel %vm162, %v156, %v163
    %vm165 = vcmp.eq.s32.totalorder %v160, 2
    %v166 = vxor.u32 %v156, 2147483648
    %v167 = vsel %vm165, %v166, %v157
    %v168 = vsel %vm161, %v164, %v167
    %v169 = vsel %vm158, nan, %v168
    %v170 = vrot.slane %v34, 5
    %v172 = vadd.f32 %v169, %v170
    %v174 = vrot.slane %v65, 7
    %v176 = vmul.f32 %v172, %v174
    %v177 = vsub.f32 1.0, %v65
    %v179 = vrot.slane %v177, 1
    %v181 = vmul.f32 %v34, %v179
    %v183 = vrot.slane %v181, 6
    %v185 = vadd.f32 %v176, %v183
    %vm186 = vcmask 778240
    %187 = vst.msk [vmem:[%s2] sm:$0x1] %vm186, %v185
    %s188 = sld [smem:[#allocation2 + $0x80]]
    %s189 = sld [smem:[#allocation2 + $0x81]]
    %s190 = sld [smem:[#allocation2 + $0x82]]
    %s191 = sld [smem:[#allocation2 + $0x83]]
    %s192 = sld [smem:[#allocation2 + $0x84]]
    %v193 = vstv %s188
    %v194 = vmul.f32 %v193, %v34
    %v195 = vstv %s189
    %v196 = vmul.f32 %v195, %v34
    %v198 = vrot.slane %v196, 1
    %v200 = vadd.f32 %v194, %v198
    %v201 = vstv %s190
    %v202 = vmul.f32 %v201, %v34
    %v204 = vrot.slane %v202, 2
    %v206 = vadd.f32 %v200, %v204
    %v207 = vstv %s191
    %v208 = vmul.f32 %v207, %v34
    %v210 = vrot.slane %v208, 3
    %v212 = vadd.f32 %v206, %v210
    %v213 = vadd.f32 %v212, %v61
    %v214 = vstv %s192
    %v215 = vmul.f32 %v34, %v214
    %v216 = vand.u32 2147483647, %v213
    %vm217 = vcmp.le.f32.partialorder %v216, 0.7853982
    %vm218 = vcmp.lt.s32.totalorder %v213, 0
    %v219 = vand.u32 %v213, 2139095040
    %v220 = vshrl.u32 %v219, 23
    %v221 = vsub.s32 %v220, 127
    %v222 = vand.u32 2147483647, %v213
    %v223 = vand.u32 %v222, 8388607
    %v224 = vor.u32 %v223, 8388608
    %v225 = vsub.s32 0, %v224
    %v226 = vadd.s32 %v221, 1
    %vm227 = vcmp.gt.s32.totalorder %v226, 0
    %v228 = vsel %vm227, %v226, 0
    %v229 = vshrl.u32 %v228, 5
    %v230 = vand.u32 %v228, 31
    %v231 = vsub.s32 32, %v230
    %v232 = vshrl.u32 683565275, %v231
    %v233 = vshll.u32 683565275, %v230
    %v234 = vshrl.u32 2475754826, %v231
    %v235 = vor.u32 %v233, %v234
    %v236 = vshll.u32 2475754826, %v230
    %v237 = vshrl.u32 2131351028, %v231
    %v238 = vor.u32 %v236, %v237
    %v239 = vshll.u32 2131351028, %v230
    %v240 = vshrl.u32 2102212464, %v231
    %v241 = vor.u32 %v239, %v240
    %v242 = vshll.u32 2102212464, %v230
    %v243 = vshrl.u32 920167782, %v231
    %v244 = vor.u32 %v242, %v243
    %v245 = vshll.u32 920167782, %v230
    %v246 = vshrl.u32 1326507024, %v231
    %v247 = vor.u32 %v245, %v246
    %vm248 = vcmp.lt.s32.totalorder %v229, 1
    %vm249 = vcmp.lt.s32.totalorder %v229, 2
    %vm250 = vcmp.lt.s32.totalorder %v229, 3
    %vm251 = vcmp.lt.s32.totalorder %v229, 4
    %v252 = vsel %vm248, %v232, %v235
    %v253 = vsel %vm251, %v241, 2102212464
    %v254 = vsel %vm250, %v238, %v253
    %v255 = vsel %vm249, %v252, %v254
    %v256 = vsel %vm248, %v235, %v238
    %v257 = vsel %vm251, %v244, 920167782
    %v258 = vsel %vm250, %v241, %v257
    %v259 = vsel %vm249, %v256, %v258
    %v260 = vsel %vm248, %v238, %v241
    %v261 = vsel %vm251, %v247, 1326507024
    %v262 = vsel %vm250, %v244, %v261
    %v263 = vsel %vm249, %v260, %v262
    %v264 = vshll.u32 %v224, 8
    %v265 = vmul.u32.u64.compose %v264, %v263
    %v266 = vextract.low.u32 %v265
    %v267 = vextract.high.u32 %v265
    %v268 = vmul.u32.u64.compose %v264, %v259
    %v269 = vextract.low.u32 %v268
    %v270 = vextract.high.u32 %v268
    %v271 = vmul.u32 %v264, %v255
    %v272 = vadd.s32 %v267, %v269
    %vm273 = vc.u32 %v267, %v269
    %v274 = vadd.s32 %v270, 1
    %v275 = vsel %vm273, %v274, %v270
    %v276 = vadd.s32 %v271, %v275
    %v277 = vadd.s32 %v276, 536870912
    %v278 = vshrl.u32 %v277, 30
    %v279 = vshll.u32 %v278, 30
    %v280 = vsub.s32 %v276, %v279
    %vm281 = vcmp.lt.s32.totalorder %v280, 0
    %v282 = vsub.s32 0, %v280
    %v283 = vsel %vm281, %v282, %v280
    %v284 = vclz %v283
    %v285 = vsub.s32 %v284, 2
    %vm286 = vcmp.gt.s32.totalorder 0, %v285
    %v287 = vsel %vm286, 0, %v285
    %v288 = vsub.s32 32, %v287
    %v289 = vshll.u32 %v280, %v287
    %v290 = vshrl.u32 %v272, %v288
    %v291 = vor.u32 %v289, %v290
    %v292 = vsub.s32 4294967266, %v287
    %v293 = vadd.s32 %v292, 127
    %v294 = vshll.u32 %v293, 23
    %v295 = vor.u32 4788187, %v294
    %v296 = vand.u32 2147483647, %v295
    %v298 = vcvt.s32.f32 %v291
    %v299 = vmul.f32 %v298, %v296
    %v300 = vxor.u32 %v299, 2147483648
    %v301 = vsel %vm218, %v300, %v299
    %v302 = vsub.s32 4, %v278
    %v303 = vsel %vm218, %v302, %v278
    %v304 = vsel %vm217, %v213, %v301
    %v305 = vsel %vm217, 0, %v303
    %v306 = vcosq.f32.pop %v304
    %v307 = vsinq.f32.pop %v304
    %vm308 = vweird.f32 %v213
    %v309 = vadd.s32 %v305, 3
    %v310 = vand.u32 %v309, 3
    %vm311 = vcmp.lt.s32.totalorder %v310, 2
    %vm312 = vcmp.eq.s32.totalorder %v310, 0
    %v313 = vxor.u32 %v307, 2147483648
    %v314 = vsel %vm312, %v306, %v313
    %vm315 = vcmp.eq.s32.totalorder %v310, 2
    %v316 = vxor.u32 %v306, 2147483648
    %v317 = vsel %vm315, %v316, %v307
    %v318 = vsel %vm311, %v314, %v317
    %v319 = vsel %vm308, nan, %v318
    %v320 = vadd.f32 %v319, %v170
    %v322 = vrot.slane %v215, 7
    %v324 = vmul.f32 %v320, %v322
    %v325 = vsub.f32 1.0, %v215
    %v327 = vrot.slane %v325, 1
    %v329 = vmul.f32 %v34, %v327
    %v331 = vrot.slane %v329, 6
    %v333 = vadd.f32 %v324, %v331
    %334 = vst.msk [vmem:[%s2 + $0x1] sm:$0x1] %vm186, %v333
    // Predicated region
    $region18: #{prompt_encoder_forward.1} parent=1 // pred_check
      _
    $region19: #{prompt_encoder_forward.1} parent=1 // pred_check_branch
      %336 = sbr.rel (0) target = $region21
    $region20: #{prompt_encoder_forward.1} parent=1 // pred_region
      _
    $region21: #{prompt_encoder_forward.1} parent=1 // pred_fallthru
      _
    // Predicated region
    $region22: #{prompt_encoder_forward.1} parent=1 // pred_check
      _
    $region23: #{prompt_encoder_forward.1} parent=1 // pred_check_branch
      %338 = sbr.rel (0) target = $region25
    $region24: #{prompt_encoder_forward.1} parent=1 // pred_region
      _
    $region25: #{prompt_encoder_forward.1} parent=1 // pred_fallthru
      _
    %339 = vsyncpa [#allocation3], 1
    %340 = vsyncpa [#allocation4], 1

</llo_original>
